<compile_context>
chip_gen: v7x
topology: tpu7x:2x2x1
jax: 0.10.0
libtpu: 0.0.40
codegen_flags: <defaults>
</compile_context>

<pallas_src>
import jax
import jax.numpy as jnp
from jax.experimental import pallas as pl
from jax.experimental.pallas import tpu as pltpu


def _adjacency_fwd_kernel(logw_ref, z0_ref, z1_ref, h0_ref, h1_ref, proba_ref):
    # (K, 1) component scales, broadcast across lanes; exp on the EUP (free slot).
    w = jnp.exp(logw_ref[...].astype(jnp.float32))                 # (K, 1)
    z0 = z0_ref[...].astype(jnp.float32)                           # (K, TN)
    z1 = z1_ref[...].astype(jnp.float32)                           # (K, TN)
    # Weighted inner product per column (= per dyad): VPU elementwise multiply,
    # then a K-deep sublane reduce (K is tiny, this is cheap).
    inner = jnp.sum(z0 * w * z1, axis=0, keepdims=True)            # (1, TN)
    logit = (inner
             + h0_ref[...].astype(jnp.float32)
             + h1_ref[...].astype(jnp.float32))                    # (1, TN)
    proba_ref[...] = jax.nn.sigmoid(logit).astype(proba_ref.dtype)


def _round_up(x, m):
    return ((x + m - 1) // m) * m


def adjacency_forward(log_components, z0, z1, h0, h1, *, tile_lanes=65536):
    """Pallas equivalent of AdjacencyModel.forward.

    log_components: (1, K) float32   (module parameter; w = exp(log_components))
    z0, z1:         (N, K) float32   latent positions of the two endpoints
    h0, h1:         (N, 1) float32   latent heterogeneities of the two endpoints
    returns:        proba (N, 1) float32
    """
    N, K = z0.shape
    assert z1.shape == (N, K)
    assert h0.shape == (N, 1) and h1.shape == (N, 1)
    assert log_components.shape == (1, K)

    # Lane-dense layout: rows -> lanes, K -> sublanes.
    z0_t = jnp.transpose(z0)                      # (K, N)
    z1_t = jnp.transpose(z1)                      # (K, N)
    h0_t = jnp.reshape(h0, (1, N))                # free contiguous reshape
    h1_t = jnp.reshape(h1, (1, N))
    logw = jnp.transpose(log_components)          # (K, 1) column, lane-broadcast

    # Tile over the lane (row) axis; tile must be a multiple of 128.
    tn = min(_round_up(max(tile_lanes, 128), 128), _round_up(N, 128))
    n_tiles = pl.cdiv(N, tn)

    cost = pl.CostEstimate(
        flops=N * (3 * K + 2),
        transcendentals=N + n_tiles * K,          # sigmoid per row + exp per tile
        bytes_accessed=4 * (2 * N * K + 3 * N + K),
    )

    out = pl.pallas_call(
        _adjacency_fwd_kernel,
        out_shape=jax.ShapeDtypeStruct((1, N), z0.dtype),
        grid=(n_tiles,),
        in_specs=[
            pl.BlockSpec((K, 1), lambda i: (0, 0)),     # log_components: resident
            pl.BlockSpec((K, tn), lambda i: (0, i)),    # z0: lane tiles
            pl.BlockSpec((K, tn), lambda i: (0, i)),    # z1: lane tiles
            pl.BlockSpec((1, tn), lambda i: (0, i)),    # h0
            pl.BlockSpec((1, tn), lambda i: (0, i)),    # h1
        ],
        out_specs=pl.BlockSpec((1, tn), lambda i: (0, i)),
        compiler_params=pltpu.CompilerParams(
            # Megacore sharding of the row tiles on v7x; neutral on v5e/v6e.
            # If v7x wall time does not ~halve, switch to pltpu.CORE_PARALLEL.
            dimension_semantics=("parallel",),
        ),
        cost_estimate=cost,
    )(logw, z0_t, z1_t, h0_t, h1_t)

    return jnp.reshape(out, (N, 1))


def reference_forward(log_components, z0, z1, h0, h1):
    w = jnp.exp(log_components)
    inner = jnp.sum(z0 * w * z1, axis=1, keepdims=True)
    logit = inner + h0 + h1
    return jax.nn.sigmoid(logit)


if __name__ == "__main__":
    # Small shapes consistent with the module: latent dim K = 4, N = 8 dyads.
    K = 4
    N = 8

    key = jax.random.PRNGKey(0)
    k_w, k_z0, k_z1, k_h0, k_h1 = jax.random.split(key, 5)

    # estimate_components=True -> log_components is a sorted random row vector.
    log_components = jnp.sort(
        jax.random.normal(k_w, (1, K), dtype=jnp.float32), axis=1
    )[:, ::-1]
    latent_position0 = jax.random.normal(k_z0, (N, K), dtype=jnp.float32)
    latent_position1 = jax.random.normal(k_z1, (N, K), dtype=jnp.float32)
    latent_heterogeneity0 = jax.random.normal(k_h0, (N, 1), dtype=jnp.float32) * 0.5
    latent_heterogeneity1 = jax.random.normal(k_h1, (N, 1), dtype=jnp.float32) * 0.5

    proba = adjacency_forward(
        log_components,
        latent_position0,
        latent_position1,
        latent_heterogeneity0,
        latent_heterogeneity1,
    )
    jax.block_until_ready(proba)

    ref = reference_forward(
        log_components,
        latent_position0,
        latent_position1,
        latent_heterogeneity0,
        latent_heterogeneity1,
    )
    assert proba.shape == (N, 1)
    assert jnp.allclose(proba, ref, atol=1e-5, rtol=1e-5)

    # Exercise the multi-tile + ragged (partial last block) path at a still-small size.
    N2 = 1000
    z0b = jax.random.normal(jax.random.PRNGKey(1), (N2, K), dtype=jnp.float32)
    z1b = jax.random.normal(jax.random.PRNGKey(2), (N2, K), dtype=jnp.float32)
    h0b = jax.random.normal(jax.random.PRNGKey(3), (N2, 1), dtype=jnp.float32) * 0.5
    h1b = jax.random.normal(jax.random.PRNGKey(4), (N2, 1), dtype=jnp.float32) * 0.5
    proba2 = adjacency_forward(log_components, z0b, z1b, h0b, h1b, tile_lanes=256)
    jax.block_until_ready(proba2)
    ref2 = reference_forward(log_components, z0b, z1b, h0b, h1b)
    assert proba2.shape == (N2, 1)
    assert jnp.allclose(proba2, ref2, atol=1e-5, rtol=1e-5)

    # TODO(synk): log_likelihood (A*log(p)+(1-A)*log(1-p) nansum) is not part of
    # forward() and is left to plain JAX.

    print("KERNEL_OK")
</pallas_src>

<mosaic_0001>
module attributes {stable_mosaic.version = 11 : i64} {
  func.func @_adjacency_fwd_kernel(%arg0: i32, %arg1: memref<4x1xf32, #tpu.memory_space<vmem>>, %arg2: memref<4x128xf32, #tpu.memory_space<vmem>>, %arg3: memref<4x128xf32, #tpu.memory_space<vmem>>, %arg4: memref<1x128xf32, #tpu.memory_space<vmem>>, %arg5: memref<1x128xf32, #tpu.memory_space<vmem>>, %arg6: memref<1x128xf32, #tpu.memory_space<vmem>>) attributes {dimension_semantics = [#tpu.dimension_semantics<parallel>], iteration_bounds = array<i64: 1>, scalar_prefetch = 0 : i64, scratch_operands = 0 : i64, tpu.core_type = #tpu.core_type<tc>, window_params = [{pipeline_mode = #tpu.pipeline_mode<synchronous>, transform_indices = @transform_0, window_bounds = array<i64: 4, 1>}, {transform_indices = @transform_1, window_bounds = array<i64: 4, 128>}, {transform_indices = @transform_2, window_bounds = array<i64: 4, 128>}, {transform_indices = @transform_3, window_bounds = array<i64: 1, 128>}, {transform_indices = @transform_4, window_bounds = array<i64: 1, 128>}, {transform_indices = @transform_5, window_bounds = array<i64: 1, 128>}]} {
    %c0 = arith.constant 0 : index
    %c0_0 = arith.constant 0 : index
    %0 = vector.load %arg1[%c0, %c0_0] : memref<4x1xf32, #tpu.memory_space<vmem>>, vector<4x1xf32>
    %1 = math.exp %0 : vector<4x1xf32>
    %c0_1 = arith.constant 0 : index
    %c0_2 = arith.constant 0 : index
    %2 = vector.load %arg2[%c0_1, %c0_2] : memref<4x128xf32, #tpu.memory_space<vmem>>, vector<4x128xf32>
    %c0_3 = arith.constant 0 : index
    %c0_4 = arith.constant 0 : index
    %3 = vector.load %arg3[%c0_3, %c0_4] : memref<4x128xf32, #tpu.memory_space<vmem>>, vector<4x128xf32>
    %4 = vector.broadcast %1 : vector<4x1xf32> to vector<4x128xf32>
    %5 = arith.mulf %2, %4 : vector<4x128xf32>
    %6 = arith.mulf %5, %3 : vector<4x128xf32>
    %cst = arith.constant dense<0.000000e+00> : vector<128xf32>
    %7 = vector.multi_reduction <add>, %6, %cst [0] : vector<4x128xf32> to vector<128xf32>
    %8 = vector.shape_cast %7 : vector<128xf32> to vector<1x128xf32>
    %c0_5 = arith.constant 0 : index
    %c0_6 = arith.constant 0 : index
    %9 = vector.load %arg4[%c0_5, %c0_6] : memref<1x128xf32, #tpu.memory_space<vmem>>, vector<1x128xf32>
    %10 = arith.addf %8, %9 : vector<1x128xf32>
    %c0_7 = arith.constant 0 : index
    %c0_8 = arith.constant 0 : index
    %11 = vector.load %arg5[%c0_7, %c0_8] : memref<1x128xf32, #tpu.memory_space<vmem>>, vector<1x128xf32>
    %12 = arith.addf %10, %11 : vector<1x128xf32>
    %13 = arith.negf %12 : vector<1x128xf32>
    %14 = math.exp %13 : vector<1x128xf32>
    %cst_9 = arith.constant 1.000000e+00 : f32
    %15 = vector.broadcast %cst_9 : f32 to vector<1x128xf32>
    %16 = arith.addf %15, %14 : vector<1x128xf32>
    %17 = arith.divf %15, %16 : vector<1x128xf32>
    %c0_10 = arith.constant 0 : index
    %c0_11 = arith.constant 0 : index
    %18 = vector.load %arg6[%c0_10, %c0_11] : memref<1x128xf32, #tpu.memory_space<vmem>>, vector<1x128xf32>
    tpu.vector_store %arg6[%c0_10, %c0_11], %17 {strides = array<i32>} : memref<1x128xf32, #tpu.memory_space<vmem>>, vector<1x128xf32>,
    return
  }
  func.func @transform_0(%arg0: i32) -> (i32, i32) {
    %c0_i32 = arith.constant 0 : i32
    %c0_i32_0 = arith.constant 0 : i32
    %c0_i32_1 = arith.constant 0 : i32
    return %c0_i32, %c0_i32_0 : i32, i32
  }
  func.func @transform_1(%arg0: i32) -> (i32, i32) {
    %c0_i32 = arith.constant 0 : i32
    %c0_i32_0 = arith.constant 0 : i32
    return %c0_i32, %arg0 : i32, i32
  }
  func.func @transform_2(%arg0: i32) -> (i32, i32) {
    %c0_i32 = arith.constant 0 : i32
    %c0_i32_0 = arith.constant 0 : i32
    return %c0_i32, %arg0 : i32, i32
  }
  func.func @transform_3(%arg0: i32) -> (i32, i32) {
    %c0_i32 = arith.constant 0 : i32
    %c0_i32_0 = arith.constant 0 : i32
    return %c0_i32, %arg0 : i32, i32
  }
  func.func @transform_4(%arg0: i32) -> (i32, i32) {
    %c0_i32 = arith.constant 0 : i32
    %c0_i32_0 = arith.constant 0 : i32
    return %c0_i32, %arg0 : i32, i32
  }
  func.func @transform_5(%arg0: i32) -> (i32, i32) {
    %c0_i32 = arith.constant 0 : i32
    %c0_i32_0 = arith.constant 0 : i32
    return %c0_i32, %arg0 : i32, i32
  }
}

</mosaic_0001>

<llo_original>
// kernel: tpu_custom_call.1
$region0: #{tpu_custom_call.1}
  #allocation0 [shape = 'u32[]', space=smem, size = 0x4, offset = 0x4, fixed_abs, tag = 'smem constant byte address 0x4 - core index']
  #allocation1 [shape = 'u32[144,128]{1,0:T(1,128)}', space=vmem, size = 0x12000, scoped, tag = 'internal scratch']
  %s0 = inlined_call_operand.vmem [shape: f32[4,1], index: 0, kind: input, shape index: {}]
  %s1 = inlined_call_operand.vmem [shape: f32[4,8], index: 1, kind: input, shape index: {}]
  %s2 = inlined_call_operand.vmem [shape: f32[4,8], index: 2, kind: input, shape index: {}]
  %s3 = inlined_call_operand.vmem [shape: f32[1,8], index: 3, kind: input, shape index: {}]
  %s4 = inlined_call_operand.vmem [shape: f32[1,8], index: 4, kind: input, shape index: {}]
  %s5 = inlined_call_operand.hbm [shape: f32[1,8], index: 5, kind: output, shape index: {}]
  %s6 = sld [smem:[#allocation0]]
  $region30: #{tpu_custom_call.1} parent=0
    _
  %s8 = ssub.s32 1, %s6
  %s9 = scalar_select 0, %s8, %s6
  $region1: #{tpu_custom_call.1} parent=0
    #allocation2 [shape = 'u8[512]{0}', space=vmem, size = 0x400, scoped, tag = 'output window, operand 0, single buffered']
    #allocation3 [shape = 's32[1]{0}', space=sflag, size = 0x4, scoped, tag = 'scoped memory for tpu_custom_call.1']
    %10 = vsyncpa [#allocation3], 0
    // Predicated region
    $region2: #{tpu_custom_call.1} parent=1 // pred_check
      _
    $region3: #{tpu_custom_call.1} parent=1 // pred_check_branch
      %12 = sbr.rel (0) target = $region5
    $region4: #{tpu_custom_call.1} parent=1 // pred_region
      _
    $region5: #{tpu_custom_call.1} parent=1 // pred_fallthru
      _
    // Predicated region
    $region6: #{tpu_custom_call.1} parent=1 // pred_check
      _
    $region7: #{tpu_custom_call.1} parent=1 // pred_check_branch
      %14 = sbr.rel (0) target = $region9
    $region8: #{tpu_custom_call.1} parent=1 // pred_region
      _
    $region9: #{tpu_custom_call.1} parent=1 // pred_fallthru
      _
    // Predicated region
    $region10: #{tpu_custom_call.1} parent=1 // pred_check
      _
    $region11: #{tpu_custom_call.1} parent=1 // pred_check_branch
      %16 = sbr.rel (0) target = $region13
    $region12: #{tpu_custom_call.1} parent=1 // pred_region
      _
    $region13: #{tpu_custom_call.1} parent=1 // pred_fallthru
      _
    // Predicated region
    $region14: #{tpu_custom_call.1} parent=1 // pred_check
      _
    $region15: #{tpu_custom_call.1} parent=1 // pred_check_branch
      %18 = sbr.rel (0) target = $region17
    $region16: #{tpu_custom_call.1} parent=1 // pred_region
      _
    $region17: #{tpu_custom_call.1} parent=1 // pred_fallthru
      _
    // Predicated region
    $region18: #{tpu_custom_call.1} parent=1 // pred_check
      _
    $region19: #{tpu_custom_call.1} parent=1 // pred_check_branch
      %20 = sbr.rel (0) target = $region21
    $region20: #{tpu_custom_call.1} parent=1 // pred_region
      _
    $region21: #{tpu_custom_call.1} parent=1 // pred_fallthru
      _
    %v21 = vld [vmem:[%s0] sm:$0xf]
    %v22 = vmul.f32 %v21, 1.442695
    %v23 = vpow.pop %v22
    %v24 = vld [vmem:[%s1] sm:$0xf]
    %v25 = vld [vmem:[%s2] sm:$0xf]
    %27 = vset.pattern.permute.xlu0 0
    %28 = vperm.xlu0 %27, %v23
    %v29 = vpop.permute.xlu0 %28
    %v31 = vmul.f32 %v24, %v29
    %v32 = vmul.f32 %v31, %v25
    %vm33 = vcmask 1043456
    %v34 = vsel %vm33, %v32, 0.0
    %v35 = vrot.slane %v34, 4
    %v36 = vadd.f32 %v34, %v35
    %v37 = vrot.slane %v36, 2
    %v38 = vadd.f32 %v36, %v37
    %v39 = vrot.slane %v38, 1
    %v40 = vadd.f32 %v38, %v39
    %v41 = vld [vmem:[%s3] sm:$0x1]
    %v42 = vadd.f32 %v40, %v41
    %v43 = vld [vmem:[%s4] sm:$0x1]
    %v44 = vadd.f32 %v42, %v43
    %v45 = vxor.u32 %v44, 2147483648
    %v46 = vmul.f32 %v45, 1.442695
    %v47 = vpow.pop %v46
    %v48 = vadd.f32 %v47, 1.0
    %v49 = vrcp.pop %v48
    %v50 = vmul.f32 1.0, %v49
    %51 = vst [vmem:[#allocation2] sm:$0x1] %v50
    // Predicated region
    $region22: #{tpu_custom_call.1} parent=1 // pred_check
      _
    $region23: #{tpu_custom_call.1} parent=1 // pred_check_branch
      %53 = sbr.rel (0) target = $region25
    $region24: #{tpu_custom_call.1} parent=1 // pred_region
      %s55 = ssub.s32 16, 16
      %56 = vsyncadd [#allocation3], %s55
      %s58 = sshll.u32 [#allocation2], 4
      %s59 = int_to_ptr.vmem [resolvable:$true] %s58
      %61 = dma.vmem_to_hbm [thread:$0]  %s59, 16, %s5, [#allocation3]
    $region25: #{tpu_custom_call.1} parent=1 // pred_fallthru
      _
    // Predicated region
    $region26: #{tpu_custom_call.1} parent=1 // pred_check
      _
    $region27: #{tpu_custom_call.1} parent=1 // pred_check_branch
      %63 = sbr.rel (0) target = $region29
    $region28: #{tpu_custom_call.1} parent=1 // pred_region
      %64 = dma.done [#allocation3], 16
    $region29: #{tpu_custom_call.1} parent=1 // pred_fallthru
      _
    %65 = vsyncpa [#allocation3], 1

</llo_original>
